<compile_context>
chip_gen: v5e
topology: v5e:2x2
jax: 0.10.0
libtpu: 0.0.40
codegen_flags: <defaults>
</compile_context>

<pallas_src>
import jax
import jax.numpy as jnp
from jax import lax
from jax.experimental import pallas as pl
from jax.experimental.pallas import tpu as pltpu

LN_EPS = 1e-5


def _round_up(x, m):
    return ((x + m - 1) // m) * m


def _vmem_capacity_bytes():
    try:
        return int(pltpu.get_tpu_info().vmem_capacity_bytes)
    except Exception:
        return 64 * 1024 * 1024  # conservative fallback (v7x per-TC physical VMEM)


# ----------------------------------------------------------------------------- kernel
def dense_layer_kernel(x_ref, gamma_ref, beta_ref, w_ref, b_ref, o_ref, h_ref):
    # x_ref:    (TM, D)   input row tile (resident across the column axis)
    # gamma_ref:(1, D)    LayerNorm weight
    # beta_ref: (1, D)    LayerNorm bias
    # w_ref:    (D, TN)   Linear weight block (pre-transposed: y = h @ W^T)
    # b_ref:    (1, TN)   Linear bias block
    # o_ref:    (TM, TN)  output tile
    # h_ref:    (TM, D)   VMEM scratch caching LayerNorm+ReLU output for this row tile
    col = pl.program_id(1)

    @pl.when(col == 0)
    def _():
        # LayerNorm + ReLU once per row tile; cached for all column blocks.
        x = x_ref[...].astype(jnp.float32)
        inv_d = jnp.float32(1.0 / x.shape[-1])
        # One-shot statistics: two independent cross-lane reductions.
        s1 = jnp.sum(x, axis=-1, keepdims=True)
        s2 = jnp.sum(x * x, axis=-1, keepdims=True)
        mean = s1 * inv_d
        var = jnp.maximum(s2 * inv_d - mean * mean, 0.0)
        inv = lax.rsqrt(var + LN_EPS)
        # Affine + ReLU in the compute (weight) dtype; stats stayed in f32.
        xn = ((x - mean) * inv).astype(h_ref.dtype)
        gamma = gamma_ref[...].astype(h_ref.dtype)
        beta = beta_ref[...].astype(h_ref.dtype)
        h_ref[...] = jnp.maximum(xn * gamma + beta, 0.0).astype(h_ref.dtype)

    # MXU matmul with f32 accumulation.
    y = jnp.dot(h_ref[...], w_ref[...], preferred_element_type=jnp.float32)
    y = y + b_ref[...].astype(jnp.float32)
    o_ref[...] = y.astype(o_ref.dtype)


# ------------------------------------------------------------------------- tile logic
def _select_tiles(rows, in_dim, out_dim_p, x_isz, w_isz, budget, row_tile, col_tile):
    # Column tile: keep the whole (padded) out_dim resident unless the weight block
    # alone would eat more than half the budget.
    if col_tile is None:
        col_tile = out_dim_p
        while col_tile > 128 and 2 * in_dim * col_tile * w_isz > budget // 2:
            col_tile = max(128, _round_up(col_tile // 2, 128))

    def fits(rt):
        x_blk = 2 * rt * in_dim * x_isz              # double-buffered input block
        o_blk = 2 * rt * col_tile * x_isz            # double-buffered output block
        w_blk = 2 * in_dim * col_tile * w_isz        # double-buffered weight block
        params = 2 * (2 * in_dim * 4 + col_tile * 4)  # gamma/beta/bias buffers
        h_scr = rt * in_dim * w_isz                  # cached activations (scratch)
        # In-body temporaries: x_f32, x*x, (x-mean) in f32, the compute-dtype cast of
        # the normalized tile, and the f32 matmul result.
        tmps = 3 * rt * in_dim * 4 + rt * in_dim * w_isz + rt * col_tile * 4
        return x_blk + o_blk + w_blk + params + h_scr + tmps <= budget

    if row_tile is None:
        row_tile = min(1024, _round_up(rows, 8))
        while row_tile > 8 and not fits(row_tile):
            row_tile = _round_up(max(8, row_tile // 2), 8)
    return row_tile, col_tile


# ------------------------------------------------------------------------ public API
def prepare_dense_layer_params(ln_weight, ln_bias, lin_weight, lin_bias):
    """One-time parameter prep (store this as model state): transpose + lane-pad W."""
    out_dim, in_dim = lin_weight.shape
    out_dim_p = _round_up(out_dim, 128)
    pad = out_dim_p - out_dim
    gamma = ln_weight.reshape(1, in_dim)
    beta = ln_bias.reshape(1, in_dim)
    w_t = lin_weight.T                       # (in_dim, out_dim)
    b = lin_bias.reshape(1, out_dim)
    if pad:
        w_t = jnp.pad(w_t, ((0, 0), (0, pad)))
        b = jnp.pad(b, ((0, 0), (0, pad)))
    return {"gamma": gamma, "beta": beta, "w_t": w_t, "b": b,
            "in_dim": in_dim, "out_dim": out_dim, "out_dim_p": out_dim_p}


def dense_layer_apply(feat, params, *, row_tile=None, col_tile=None):
    """feat: [..., in_dim]; params from prepare_dense_layer_params."""
    in_dim = params["in_dim"]
    out_dim = params["out_dim"]
    out_dim_p = params["out_dim_p"]
    gamma, beta, w_t, b = params["gamma"], params["beta"], params["w_t"], params["b"]

    orig_shape = feat.shape
    x = feat.reshape(-1, in_dim)
    rows = x.shape[0]

    x_isz = jnp.dtype(feat.dtype).itemsize
    w_isz = jnp.dtype(w_t.dtype).itemsize

    # Per-generation VMEM management.
    vmem_cap = _vmem_capacity_bytes()
    vmem_limit = min((vmem_cap * 3) // 4, 100 * 1024 * 1024)   # scoped limit we request
    budget = (vmem_limit * 4) // 5                             # headroom for Mosaic internals

    row_tile, col_tile = _select_tiles(rows, in_dim, out_dim_p, x_isz, w_isz,
                                       budget, row_tile, col_tile)

    # Row axis outer ("parallel" -> megacore shards it); column axis inner
    # ("arbitrary" -> h scratch carries the cached LN+ReLU across column blocks).
    grid = (pl.cdiv(rows, row_tile), pl.cdiv(out_dim_p, col_tile))

    out = pl.pallas_call(
        dense_layer_kernel,
        out_shape=jax.ShapeDtypeStruct((rows, out_dim_p), feat.dtype),
        grid_spec=pltpu.PrefetchScalarGridSpec(
            num_scalar_prefetch=0,
            grid=grid,
            in_specs=[
                pl.BlockSpec((row_tile, in_dim), lambda i, j: (i, 0)),   # x (resident over j)
                pl.BlockSpec((1, in_dim), lambda i, j: (0, 0)),          # gamma
                pl.BlockSpec((1, in_dim), lambda i, j: (0, 0)),          # beta
                pl.BlockSpec((in_dim, col_tile), lambda i, j: (0, j)),   # W^T block
                pl.BlockSpec((1, col_tile), lambda i, j: (0, j)),        # bias block
            ],
            out_specs=pl.BlockSpec((row_tile, col_tile), lambda i, j: (i, j)),
            scratch_shapes=[pltpu.VMEM((row_tile, in_dim), w_t.dtype)],  # cached h
        ),
        compiler_params=pltpu.CompilerParams(
            dimension_semantics=("parallel", "arbitrary"),
            vmem_limit_bytes=int(vmem_limit)),
    )(x, gamma, beta, w_t, b)

    if out_dim_p != out_dim:
        out = out[:, :out_dim]
    return out.reshape(*orig_shape[:-1], out_dim)


def dense_layer(feat, ln_weight, ln_bias, lin_weight, lin_bias, **kw):
    """Convenience wrapper (prefer prepare_... once + dense_layer_apply in real use)."""
    return dense_layer_apply(feat, prepare_dense_layer_params(
        ln_weight, ln_bias, lin_weight, lin_bias), **kw)


# -------------------------------------------------------------------------- reference
def dense_layer_ref(feat, ln_weight, ln_bias, lin_weight, lin_bias):
    x = feat.astype(jnp.float32)
    mean = jnp.mean(x, axis=-1, keepdims=True)
    var = jnp.mean((x - mean) ** 2, axis=-1, keepdims=True)
    xn = (x - mean) / jnp.sqrt(var + LN_EPS)
    xn = xn * ln_weight + ln_bias
    h = jnp.maximum(xn, 0.0)
    return (h @ lin_weight.T + lin_bias).astype(feat.dtype)


if __name__ == "__main__":
    key = jax.random.PRNGKey(0)
    batch, seq, in_dim, out_dim = 2, 8, 32, 48

    k1, k2, k3, k4, k5 = jax.random.split(key, 5)
    feat = jax.random.normal(k1, (batch, seq, in_dim), dtype=jnp.float32)

    # Deterministic synthetic parameters (shapes per the module's __init__).
    ln_weight = jnp.ones((in_dim,), dtype=jnp.float32) + 0.1 * jax.random.normal(k2, (in_dim,))
    ln_bias = 0.1 * jax.random.normal(k3, (in_dim,))
    lin_weight = jax.random.normal(k4, (out_dim, in_dim), dtype=jnp.float32) * (1.0 / jnp.sqrt(in_dim))
    lin_bias = 0.1 * jax.random.normal(k5, (out_dim,))

    # One-time parameter prep (model state), then the fused kernel call.
    params = prepare_dense_layer_params(ln_weight, ln_bias, lin_weight, lin_bias)
    out = dense_layer_apply(feat, params)
    out = jax.block_until_ready(out)

    ref = dense_layer_ref(feat, ln_weight, ln_bias, lin_weight, lin_bias)
    assert out.shape == (batch, seq, out_dim), out.shape
    err = float(jnp.max(jnp.abs(out - ref)))
    assert jnp.allclose(out, ref, atol=1e-4, rtol=1e-4), err

    print("KERNEL_OK")
</pallas_src>

<mosaic_0001>
module attributes {stable_mosaic.version = 11 : i64} {
  func.func @dense_layer_kernel(%arg0: i32, %arg1: i32, %arg2: memref<16x32xf32, #tpu.memory_space<vmem>>, %arg3: memref<1x32xf32, #tpu.memory_space<vmem>>, %arg4: memref<1x32xf32, #tpu.memory_space<vmem>>, %arg5: memref<32x128xf32, #tpu.memory_space<vmem>>, %arg6: memref<1x128xf32, #tpu.memory_space<vmem>>, %arg7: memref<16x128xf32, #tpu.memory_space<vmem>>, %arg8: memref<16x32xf32, #tpu.memory_space<vmem>>) attributes {dimension_semantics = [#tpu.dimension_semantics<parallel>, #tpu.dimension_semantics<arbitrary>], iteration_bounds = array<i64: 1, 1>, scalar_prefetch = 0 : i64, scratch_operands = 1 : i64, tpu.core_type = #tpu.core_type<tc>, window_params = [{transform_indices = @transform_0, window_bounds = array<i64: 16, 32>}, {pipeline_mode = #tpu.pipeline_mode<synchronous>, transform_indices = @transform_1, window_bounds = array<i64: 1, 32>}, {pipeline_mode = #tpu.pipeline_mode<synchronous>, transform_indices = @transform_2, window_bounds = array<i64: 1, 32>}, {transform_indices = @transform_3, window_bounds = array<i64: 32, 128>}, {transform_indices = @transform_4, window_bounds = array<i64: 1, 128>}, {transform_indices = @transform_5, window_bounds = array<i64: 16, 128>}]} {
    %c0_i32 = arith.constant 0 : i32
    %0 = arith.cmpi eq, %arg1, %c0_i32 : i32
    %1 = arith.extui %0 : i1 to i32
    %c0_i32_0 = arith.constant 0 : i32
    %2 = arith.cmpi ne, %1, %c0_i32_0 : i32
    scf.if %2 {
      %c0_8 = arith.constant 0 : index
      %c0_9 = arith.constant 0 : index
      %10 = vector.load %arg2[%c0_8, %c0_9] : memref<16x32xf32, #tpu.memory_space<vmem>>, vector<16x32xf32>
      %cst_10 = arith.constant dense<0.000000e+00> : vector<16xf32>
      %11 = vector.multi_reduction <add>, %10, %cst_10 [1] : vector<16x32xf32> to vector<16xf32>
      %12 = vector.shape_cast %11 : vector<16xf32> to vector<16x1xf32>
      %13 = arith.mulf %10, %10 : vector<16x32xf32>
      %cst_11 = arith.constant dense<0.000000e+00> : vector<16xf32>
      %14 = vector.multi_reduction <add>, %13, %cst_11 [1] : vector<16x32xf32> to vector<16xf32>
      %15 = vector.shape_cast %14 : vector<16xf32> to vector<16x1xf32>
      %cst_12 = arith.constant 3.125000e-02 : f32
      %16 = vector.broadcast %cst_12 : f32 to vector<16x1xf32>
      %17 = arith.mulf %12, %16 : vector<16x1xf32>
      %cst_13 = arith.constant 3.125000e-02 : f32
      %18 = vector.broadcast %cst_13 : f32 to vector<16x1xf32>
      %19 = arith.mulf %15, %18 : vector<16x1xf32>
      %20 = arith.mulf %17, %17 : vector<16x1xf32>
      %21 = arith.subf %19, %20 : vector<16x1xf32>
      %cst_14 = arith.constant 0.000000e+00 : f32
      %22 = vector.broadcast %cst_14 : f32 to vector<16x1xf32>
      %23 = arith.maximumf %21, %22 : vector<16x1xf32>
      %cst_15 = arith.constant 9.99999974E-6 : f32
      %24 = vector.broadcast %cst_15 : f32 to vector<16x1xf32>
      %25 = arith.addf %23, %24 : vector<16x1xf32>
      %26 = math.rsqrt %25 : vector<16x1xf32>
      %27 = vector.broadcast %17 : vector<16x1xf32> to vector<16x32xf32>
      %28 = arith.subf %10, %27 : vector<16x32xf32>
      %29 = vector.broadcast %26 : vector<16x1xf32> to vector<16x32xf32>
      %30 = arith.mulf %28, %29 : vector<16x32xf32>
      %c0_16 = arith.constant 0 : index
      %c0_17 = arith.constant 0 : index
      %31 = vector.load %arg3[%c0_16, %c0_17] : memref<1x32xf32, #tpu.memory_space<vmem>>, vector<1x32xf32>
      %c0_18 = arith.constant 0 : index
      %c0_19 = arith.constant 0 : index
      %32 = vector.load %arg4[%c0_18, %c0_19] : memref<1x32xf32, #tpu.memory_space<vmem>>, vector<1x32xf32>
      %33 = vector.broadcast %31 : vector<1x32xf32> to vector<16x32xf32>
      %34 = arith.mulf %30, %33 : vector<16x32xf32>
      %35 = vector.broadcast %32 : vector<1x32xf32> to vector<16x32xf32>
      %36 = arith.addf %34, %35 : vector<16x32xf32>
      %cst_20 = arith.constant 0.000000e+00 : f32
      %37 = vector.broadcast %cst_20 : f32 to vector<16x32xf32>
      %38 = arith.maximumf %36, %37 : vector<16x32xf32>
      %c0_21 = arith.constant 0 : index
      %c0_22 = arith.constant 0 : index
      %39 = vector.load %arg8[%c0_21, %c0_22] : memref<16x32xf32, #tpu.memory_space<vmem>>, vector<16x32xf32>
      tpu.vector_store %arg8[%c0_21, %c0_22], %38 {strides = array<i32>} : memref<16x32xf32, #tpu.memory_space<vmem>>, vector<16x32xf32>,
    } else {
    }
    %c0 = arith.constant 0 : index
    %c0_1 = arith.constant 0 : index
    %3 = vector.load %arg8[%c0, %c0_1] : memref<16x32xf32, #tpu.memory_space<vmem>>, vector<16x32xf32>
    %c0_2 = arith.constant 0 : index
    %c0_3 = arith.constant 0 : index
    %4 = vector.load %arg5[%c0_2, %c0_3] : memref<32x128xf32, #tpu.memory_space<vmem>>, vector<32x128xf32>
    %cst = arith.constant dense<0.000000e+00> : vector<16x128xf32>
    %5 = tpu.matmul %3, %4, %cst {dimension_numbers = #tpu.dot_dimension_numbers<[1], [0], [0], [1], [0, 0, 1, 1], [], []>} : vector<16x32xf32>, vector<32x128xf32>, vector<16x128xf32> -> vector<16x128xf32>
    %c0_4 = arith.constant 0 : index
    %c0_5 = arith.constant 0 : index
    %6 = vector.load %arg6[%c0_4, %c0_5] : memref<1x128xf32, #tpu.memory_space<vmem>>, vector<1x128xf32>
    %7 = vector.broadcast %6 : vector<1x128xf32> to vector<16x128xf32>
    %8 = arith.addf %5, %7 : vector<16x128xf32>
    %c0_6 = arith.constant 0 : index
    %c0_7 = arith.constant 0 : index
    %9 = vector.load %arg7[%c0_6, %c0_7] : memref<16x128xf32, #tpu.memory_space<vmem>>, vector<16x128xf32>
    tpu.vector_store %arg7[%c0_6, %c0_7], %8 {strides = array<i32>} : memref<16x128xf32, #tpu.memory_space<vmem>>, vector<16x128xf32>,
    return
  }
  func.func @transform_0(%arg0: i32, %arg1: i32) -> (i32, i32) {
    %c0_i32 = arith.constant 0 : i32
    %c0_i32_0 = arith.constant 0 : i32
    return %arg0, %c0_i32 : i32, i32
  }
  func.func @transform_1(%arg0: i32, %arg1: i32) -> (i32, i32) {
    %c0_i32 = arith.constant 0 : i32
    %c0_i32_0 = arith.constant 0 : i32
    %c0_i32_1 = arith.constant 0 : i32
    return %c0_i32, %c0_i32_0 : i32, i32
  }
  func.func @transform_2(%arg0: i32, %arg1: i32) -> (i32, i32) {
    %c0_i32 = arith.constant 0 : i32
    %c0_i32_0 = arith.constant 0 : i32
    %c0_i32_1 = arith.constant 0 : i32
    return %c0_i32, %c0_i32_0 : i32, i32
  }
  func.func @transform_3(%arg0: i32, %arg1: i32) -> (i32, i32) {
    %c0_i32 = arith.constant 0 : i32
    %c0_i32_0 = arith.constant 0 : i32
    return %c0_i32, %arg1 : i32, i32
  }
  func.func @transform_4(%arg0: i32, %arg1: i32) -> (i32, i32) {
    %c0_i32 = arith.constant 0 : i32
    %c0_i32_0 = arith.constant 0 : i32
    return %c0_i32, %arg1 : i32, i32
  }
  func.func @transform_5(%arg0: i32, %arg1: i32) -> (i32, i32) {
    %c0_i32 = arith.constant 0 : i32
    return %arg0, %arg1 : i32, i32
  }
}

</mosaic_0001>

<llo_original>
// kernel: tpu_custom_call.1
$region0: #{tpu_custom_call.1}
  #allocation0 [shape = 'u32[]', space=smem, size = 0x4, offset = 0x4, fixed_abs, tag = 'smem constant byte address 0x4 - core index']
  #allocation1 [shape = 'u32[72,128]{1,0:T(1,128)}', space=vmem, size = 0x9000, scoped, tag = 'internal scratch']
  #allocation2 [shape = 'f32[16,32]{1,0:T(8,128)}', space=vmem, size = 0x2000, scoped, tag = 'scratch operand']
  %s0 = inlined_call_operand.hbm [shape: f32[16,32], index: 0, kind: input, shape index: {}]
  %s1 = inlined_call_operand.hbm [shape: f32[1,32], index: 1, kind: input, shape index: {}]
  %s2 = inlined_call_operand.vmem [shape: f32[1,32], index: 2, kind: input, shape index: {}]
  %s3 = inlined_call_operand.hbm [shape: f32[32,128], index: 3, kind: input, shape index: {}]
  %s4 = inlined_call_operand.vmem [shape: f32[1,128], index: 4, kind: input, shape index: {}]
  %s5 = inlined_call_operand.hbm [shape: f32[16,128], index: 5, kind: output, shape index: {}]
  %s6 = sld [smem:[#allocation0]]
  $region46: #{tpu_custom_call.1} parent=0
    _
  %s8 = ssub.s32 1, %s6
  %s9 = scalar_select 0, %s8, %s6
  $region1: #{tpu_custom_call.1} parent=0
    #allocation3 [shape = 'u8[8192]{0}', space=vmem, size = 0x2000, scoped, tag = 'input window, operand 0, single buffered']
    #allocation4 [shape = 's32[1]{0}', space=sflag, size = 0x4, scoped, tag = 'scoped memory for tpu_custom_call.1']
    #allocation5 [shape = 's32[1]{0}', space=sflag, size = 0x4, scoped, tag = 'scoped memory for tpu_custom_call.1']
    #allocation6 [shape = 'u8[512]{0}', space=vmem, size = 0x400, scoped, tag = 'input window, operand 1, single buffered']
    #allocation7 [shape = 's32[1]{0}', space=sflag, size = 0x4, scoped, tag = 'scoped memory for tpu_custom_call.1']
    #allocation8 [shape = 'u8[16384]{0}', space=vmem, size = 0x4000, scoped, tag = 'input window, operand 3, single buffered']
    #allocation9 [shape = 'u8[8192]{0}', space=vmem, size = 0x2000, scoped, tag = 'output window, operand 0, single buffered']
    %10 = vsyncpa [#allocation4], 0
    %11 = vsyncpa [#allocation7], 0
    %12 = vsyncpa [#allocation5], 0
    // Predicated region
    $region2: #{tpu_custom_call.1} parent=1 // pred_check
      _
    $region3: #{tpu_custom_call.1} parent=1 // pred_check_branch
      %14 = sbr.rel (0) target = $region5
    $region4: #{tpu_custom_call.1} parent=1 // pred_region
      %16 = vsyncadd [#allocation4], 0
      %s17 = sshll.u32 %s0, 4
      %s18 = int_to_ptr.hbm [resolvable:$true] %s17
      %s19 = sshll.u32 [#allocation3], 4
      %s20 = int_to_ptr.vmem [resolvable:$true] %s19
      %25 = dma.hbm_to_vmem [thread:$0]  %s18, 256, %s20, [#allocation4], 128, 128, 8
    $region5: #{tpu_custom_call.1} parent=1 // pred_fallthru
      _
    // Predicated region
    $region6: #{tpu_custom_call.1} parent=1 // pred_check
      _
    $region7: #{tpu_custom_call.1} parent=1 // pred_check_branch
      %27 = sbr.rel (0) target = $region9
    $region8: #{tpu_custom_call.1} parent=1 // pred_region
      %29 = vsyncadd [#allocation7], 0
      %s31 = sshll.u32 %s1, 4
      %s32 = int_to_ptr.hbm [resolvable:$true] %s31
      %s33 = sshll.u32 [#allocation6], 4
      %s34 = int_to_ptr.vmem [resolvable:$true] %s33
      %36 = dma.hbm_to_vmem [thread:$0]  %s32, 16, %s34, [#allocation7]
    $region9: #{tpu_custom_call.1} parent=1 // pred_fallthru
      _
    // Predicated region
    $region10: #{tpu_custom_call.1} parent=1 // pred_check
      _
    $region11: #{tpu_custom_call.1} parent=1 // pred_check_branch
      %38 = sbr.rel (0) target = $region13
    $region12: #{tpu_custom_call.1} parent=1 // pred_region
      _
    $region13: #{tpu_custom_call.1} parent=1 // pred_fallthru
      _
    // Predicated region
    $region14: #{tpu_custom_call.1} parent=1 // pred_check
      _
    $region15: #{tpu_custom_call.1} parent=1 // pred_check_branch
      %40 = sbr.rel (0) target = $region17
    $region16: #{tpu_custom_call.1} parent=1 // pred_region
      %42 = vsyncadd [#allocation7], 0
      %s43 = sshll.u32 %s3, 4
      %s44 = int_to_ptr.hbm [resolvable:$true] %s43
      %s45 = sshll.u32 [#allocation8], 4
      %s46 = int_to_ptr.vmem [resolvable:$true] %s45
      %51 = dma.hbm_to_vmem [thread:$0]  %s44, 512, %s46, [#allocation7], 128, 128, 8
    $region17: #{tpu_custom_call.1} parent=1 // pred_fallthru
      _
    // Predicated region
    $region18: #{tpu_custom_call.1} parent=1 // pred_check
      _
    $region19: #{tpu_custom_call.1} parent=1 // pred_check_branch
      %53 = sbr.rel (0) target = $region21
    $region20: #{tpu_custom_call.1} parent=1 // pred_region
      _
    $region21: #{tpu_custom_call.1} parent=1 // pred_fallthru
      _
    // Predicated region
    $region22: #{tpu_custom_call.1} parent=1 // pred_check
      _
    $region23: #{tpu_custom_call.1} parent=1 // pred_check_branch
      %55 = sbr.rel (0) target = $region25
    $region24: #{tpu_custom_call.1} parent=1 // pred_region
      %57 = dma.done [#allocation4], 256
    $region25: #{tpu_custom_call.1} parent=1 // pred_fallthru
      _
    // Predicated region
    $region26: #{tpu_custom_call.1} parent=1 // pred_check
      _
    $region27: #{tpu_custom_call.1} parent=1 // pred_check_branch
      %59 = sbr.rel (0) target = $region29
    $region28: #{tpu_custom_call.1} parent=1 // pred_region
      %61 = dma.done [#allocation7], 16
    $region29: #{tpu_custom_call.1} parent=1 // pred_fallthru
      _
    // Predicated region
    $region30: #{tpu_custom_call.1} parent=1 // pred_check
      _
    $region31: #{tpu_custom_call.1} parent=1 // pred_check_branch
      %63 = sbr.rel (0) target = $region33
    $region32: #{tpu_custom_call.1} parent=1 // pred_region
      %65 = dma.done [#allocation7], 512
    $region33: #{tpu_custom_call.1} parent=1 // pred_fallthru
      _
    %p66 = scmp.eq.s32.totalorder 0, 0
    // Predicated region
    $region34: #{tpu_custom_call.1} parent=1 // pred_check
      %p67 = pneg %p66
    $region35: #{tpu_custom_call.1} parent=1 // pred_check_branch
      %69 = sbr.rel (%p67) target = $region37
    $region36: #{tpu_custom_call.1} parent=1 // pred_region
      %v70 = vld [vmem:[#allocation3] sm:$0xff]
      %v71 = vld [vmem:[#allocation3 + $0x8] sm:$0xff]
      %vm72 = vcmask 261120
      %v73 = vsel %vm72, %v70, 0.0
      %74 = vadd.xlane.f32.xlu0 %v73
      %v75 = vpop.xlane.xlu0 %74
      %v76 = vsel %vm72, %v71, 0.0
      %77 = vadd.xlane.f32.xlu0 %v76
      %v78 = vpop.xlane.xlu0 %77
      %v79 = vmul.f32 %v70, %v70
      %v80 = vmul.f32 %v71, %v71
      %v81 = vsel %vm72, %v79, 0.0
      %82 = vadd.xlane.f32.xlu0 %v81
      %v83 = vpop.xlane.xlu0 %82
      %v84 = vsel %vm72, %v80, 0.0
      %85 = vadd.xlane.f32.xlu0 %v84
      %v86 = vpop.xlane.xlu0 %85
      %v87 = vmul.f32 %v75, 0.03125
      %v88 = vmul.f32 %v78, 0.03125
      %v89 = vmul.f32 %v83, 0.03125
      %v90 = vmul.f32 %v86, 0.03125
      %v91 = vmul.f32 %v87, %v87
      %v92 = vmul.f32 %v88, %v88
      %v93 = vsub.f32 %v89, %v91
      %v94 = vsub.f32 %v90, %v92
      %v95 = vmax.f32 %v93, 0.0
      %v96 = vmax.f32 %v94, 0.0
      %v97 = vadd.f32 %v95, 1e-05
      %v98 = vadd.f32 %v96, 1e-05
      %v99 = vrsqrt.pop %v97
      %v100 = vmul.f32 %v99, %v97
      %v101 = vmul.f32 %v100, %v99
      %v102 = vmul.f32 0.5, %v101
      %v103 = vsub.f32 1.5, %v102
      %v104 = vmul.f32 %v99, %v103
      %vm105 = vweird.f32 %v97
      %vm106 = vweird.f32 %v99
      %vm107 = vmor %vm105, %vm106
      %v108 = vsel %vm107, %v99, %v104
      %v109 = vrsqrt.pop %v98
      %v110 = vmul.f32 %v109, %v98
      %v111 = vmul.f32 %v110, %v109
      %v112 = vmul.f32 0.5, %v111
      %v113 = vsub.f32 1.5, %v112
      %v114 = vmul.f32 %v109, %v113
      %vm115 = vweird.f32 %v98
      %vm116 = vweird.f32 %v109
      %vm117 = vmor %vm115, %vm116
      %v118 = vsel %vm117, %v109, %v114
      %v119 = vsub.f32 %v70, %v87
      %v120 = vsub.f32 %v71, %v88
      %v121 = vmul.f32 %v119, %v108
      %v122 = vmul.f32 %v120, %v118
      %v123 = vld [vmem:[#allocation6] sm:$0x1]
      %v124 = vld [vmem:[%s2] sm:$0x1]
      %v126 = vperm.slane %v123, 0
      %v128 = vmul.f32 %v121, %v126
      %v129 = vmul.f32 %v122, %v126
      %v131 = vperm.slane %v124, 0
      %v133 = vadd.f32 %v128, %v131
      %v134 = vadd.f32 %v129, %v131
      %v135 = vmax.f32 %v133, 0.0
      %v136 = vmax.f32 %v134, 0.0
      %137 = vst.msk [vmem:[#allocation2] sm:$0xff] %vm72, %v135
      %138 = vst.msk [vmem:[#allocation2 + $0x8] sm:$0xff] %vm72, %v136
    $region37: #{tpu_custom_call.1} parent=1 // pred_fallthru
      _
    %v139 = vld [vmem:[#allocation2] sm:$0xff]
    %v140 = vld [vmem:[#allocation2 + $0x8] sm:$0xff]
    %v141 = vld [vmem:[#allocation8] sm:$0xff]
    %v142 = vld [vmem:[#allocation8 + $0x8] sm:$0xff]
    %v143 = vld [vmem:[#allocation8 + $0x10] sm:$0xff]
    %v144 = vld [vmem:[#allocation8 + $0x18] sm:$0xff]
    %v145 = vld [vmem:[%s4] sm:$0x1]
    %v147 = vperm.slane %v145, 0
    %vm149 = vcmask 261120
    %v151 = vsel %vm149, %v139, 0
    %v154 = vsel %vm149, %v140, 0
    %156 = vmatpush.msra.mxu0 0.0
    %157 = vmatpush.msra.mxu0 0.0
    %158 = vmatpush.msra.mxu0 0.0
    %159 = vmatpush.msra.mxu0 0.0
    %160 = vmatpush.msra.mxu0 0.0
    %161 = vmatpush.msra.mxu0 0.0
    %162 = vmatpush.msra.mxu0 0.0
    %163 = vmatpush.msra.mxu0 0.0
    %164 = vmatpush.msra.mxu0 0.0
    %165 = vmatpush.msra.mxu0 0.0
    %166 = vmatpush.msra.mxu0 0.0
    %167 = vmatpush.msra.mxu0 0.0
    %168 = vmatpush.msra.mxu0 %v144
    %169 = vmatpush.msra.mxu0 %v143
    %170 = vmatpush.msra.mxu0 %v142
    %171 = vmatpush.msra.mxu0 %v141
    %172 = vmatmul.f32.gmra.mxu0 %v151
    %v173 = vpop.f32.mrf.mxu0
    %v174 = vadd.f32 %v147, %v173
    %175 = vmatmul.f32.gmra.mxu0 %v154
    %v176 = vpop.f32.mrf.mxu0
    %v177 = vadd.f32 %v147, %v176
    %178 = vdwg.mxu0
    %179 = vst [vmem:[#allocation9] sm:$0xff] %v174
    %180 = vst [vmem:[#allocation9 + $0x8] sm:$0xff] %v177
    // Predicated region
    $region38: #{tpu_custom_call.1} parent=1 // pred_check
      _
    $region39: #{tpu_custom_call.1} parent=1 // pred_check_branch
      %182 = sbr.rel (0) target = $region41
    $region40: #{tpu_custom_call.1} parent=1 // pred_region
      %184 = vsyncadd [#allocation5], 0
      %s185 = sshll.u32 [#allocation9], 4
      %s186 = int_to_ptr.vmem [resolvable:$true] %s185
      %s187 = sshll.u32 %s5, 4
      %s188 = int_to_ptr.hbm [resolvable:$true] %s187
      %193 = dma.vmem_to_hbm [thread:$0]  %s186, 256, %s188, [#allocation5], 128, 128, 8
    $region41: #{tpu_custom_call.1} parent=1 // pred_fallthru
      _
    // Predicated region
    $region42: #{tpu_custom_call.1} parent=1 // pred_check
      _
    $region43: #{tpu_custom_call.1} parent=1 // pred_check_branch
      %195 = sbr.rel (0) target = $region45
    $region44: #{tpu_custom_call.1} parent=1 // pred_region
      %197 = dma.done [#allocation5], 256
    $region45: #{tpu_custom_call.1} parent=1 // pred_fallthru
      _
    %198 = vsyncpa [#allocation4], 1
    %199 = vsyncpa [#allocation7], 1
    %200 = vsyncpa [#allocation5], 1

</llo_original>
